<compile_context>
chip_gen: v5e
topology: v5e:2x2
jax: 0.10.0
libtpu: 0.0.40
codegen_flags: <defaults>
</compile_context>

<pallas_src>
import numpy as np
import jax
import jax.numpy as jnp
from jax.experimental import pallas as pl
from jax.experimental.pallas import tpu as pltpu


def _round_up(x, m):
    return ((x + m - 1) // m) * m


def get_image_forward(x_nchw, w_oihw, bias):
    """x_nchw: (N, Cin, H, W); w_oihw: (Cout, Cin, 3, 3); bias: (Cout,)."""
    N, Cin, H, W = x_nchw.shape
    Cout = w_oihw.shape[0]
    Hp, Wp = H + 2, W + 2
    flat = Hp * Wp
    LOUT = _round_up(flat, 128)                 # lane-dense output length
    LPAD = _round_up(LOUT + 2 * Wp + 2, 128)    # input length covering max shift

    # --- wrapper glue: reflect pad (stays in NCHW), flatten spatial to lanes ---
    x_pad = jnp.pad(x_nchw.astype(jnp.float32),
                    ((0, 0), (0, 0), (1, 1), (1, 1)), mode="reflect")
    x_rows = x_pad.reshape(N * Cin, flat)                       # row = n*Cin+ci
    x_rows = jnp.pad(x_rows, ((0, 0), (0, LPAD - flat)))        # zero lane pad

    # Weight slabs: (Cout*9, N*Cin, LOUT), lane-replicated so the kernel's
    # inner loop is a pure element-wise FMA (no in-kernel lane splat).
    # Entry [co*9+tap, n*Cin+ci, :] = w[co, ci, kh, kw], tap = kh*3 + kw.
    w9 = w_oihw.astype(jnp.float32).reshape(Cout, Cin, 9)       # tap = kh*3+kw
    w9 = jnp.transpose(w9, (0, 2, 1))                           # (Cout, 9, Cin)
    w9 = jnp.tile(w9, (1, 1, N))                                # (Cout, 9, N*Cin)
    wcols = w9.reshape(Cout * 9, N * Cin, 1)
    wcols = jnp.broadcast_to(wcols, (Cout * 9, N * Cin, LOUT))  # ~324 KB f32

    bvec = bias.astype(jnp.float32).reshape(Cout)               # scalar bias -> SMEM

    shifts = tuple(kh * Wp + kw for kh in range(3) for kw in range(3))

    def kernel(x_ref, w_ref, b_ref, o_ref):
        # x_ref: (N*Cin, LPAD) VMEM   w_ref: (Cout*9, N*Cin, LOUT) VMEM
        # b_ref: (Cout,) SMEM         o_ref: (Cout*N, LOUT) VMEM
        # 9 lane-shifted views of the flattened padded image (static lane
        # slices; shared across all output channels).
        taps = [x_ref[:, s:s + LOUT] for s in shifts]

        # Row index column used to place each reduced row into the full slab
        # without relying on unaligned sublane concatenation.
        row_id = jax.lax.broadcasted_iota(jnp.int32, (Cout * N, 1), 0)
        full = jnp.zeros((Cout * N, LOUT), jnp.float32)

        for co in range(Cout):
            # Pure vmul/vadd FMA chain; init with the first tap product.
            acc = taps[0] * w_ref[co * 9]
            for t in range(1, 9):
                acc = acc + taps[t] * w_ref[co * 9 + t]
            b = b_ref[co]                                       # SMEM scalar
            for n in range(N):
                # sum the Cin sublane rows of this batch element (XLU reduce)
                row = jnp.sum(acc[n * Cin:(n + 1) * Cin], axis=0,
                              keepdims=True) + b                # (1, LOUT)
                full = full + jnp.where(row_id == (co * N + n), row, 0.0)

        # One tanh over the whole slab + one lane-dense full-block store.
        o_ref[...] = jnp.tanh(full).astype(o_ref.dtype)

    out_rows = pl.pallas_call(
        kernel,
        out_shape=jax.ShapeDtypeStruct((Cout * N, LOUT), jnp.float32),
        grid_spec=pltpu.PrefetchScalarGridSpec(
            num_scalar_prefetch=0,
            grid=(1,),   # single step: whole problem fits VMEM, overhead-bound
            in_specs=[
                pl.BlockSpec((N * Cin, LPAD), lambda i: (0, 0)),
                pl.BlockSpec((Cout * 9, N * Cin, LOUT), lambda i: (0, 0, 0)),
                pl.BlockSpec(memory_space=pltpu.MemorySpace.SMEM),
            ],
            out_specs=pl.BlockSpec((Cout * N, LOUT), lambda i: (0, 0)),
        ),
        compiler_params=pltpu.CompilerParams(
            dimension_semantics=("arbitrary",)),
        cost_estimate=pl.CostEstimate(
            flops=2 * N * H * W * Cin * Cout * 9,
            transcendentals=N * H * W * Cout,
            bytes_accessed=4 * (N * Cin * LPAD + Cout * 9 * N * Cin * LOUT
                                + Cout + Cout * N * LOUT)),
    )(x_rows, wcols, bvec)

    # --- wrapper glue: crop the valid flattened region, back to NCHW ---
    out = out_rows.reshape(Cout, N, LOUT)[:, :, :flat]
    out = out.reshape(Cout, N, Hp, Wp)[:, :, :H, :W]
    return jnp.transpose(out, (1, 0, 2, 3)).astype(x_nchw.dtype)


def reference_forward(x_nchw, w_oihw, bias):
    """Pure-JAX reference: reflect pad + conv + tanh (for correctness check)."""
    x_pad = jnp.pad(x_nchw, ((0, 0), (0, 0), (1, 1), (1, 1)), mode="reflect")
    out = jax.lax.conv_general_dilated(
        x_pad, w_oihw, window_strides=(1, 1), padding="VALID",
        dimension_numbers=("NCHW", "OIHW", "NCHW"))
    out = out + bias[None, :, None, None]
    return jnp.tanh(out)


if __name__ == "__main__":
    # Small shapes consistent with Get_image(input_dim=4, output_dim=3)
    N, Cin, H, W = 2, 4, 16, 16
    Cout = 3

    key = jax.random.PRNGKey(0)
    kx, kw, kb = jax.random.split(key, 3)

    x = jax.random.normal(kx, (N, Cin, H, W), dtype=jnp.float32)
    # deterministic synthetic parameters (Conv2d weight: (Cout, Cin, 3, 3))
    fan_in = Cin * 3 * 3
    bound = 1.0 / np.sqrt(fan_in)
    w = jax.random.uniform(kw, (Cout, Cin, 3, 3), jnp.float32, -bound, bound)
    b = jax.random.uniform(kb, (Cout,), jnp.float32, -bound, bound)

    out = get_image_forward(x, w, b)
    out = jax.block_until_ready(out)

    ref = jax.block_until_ready(reference_forward(x, w, b))
    np.testing.assert_allclose(np.asarray(out), np.asarray(ref),
                               atol=1e-5, rtol=1e-5)

    print("KERNEL_OK")
</pallas_src>

<mosaic_0001>
module attributes {stable_mosaic.version = 11 : i64} {
  func.func @kernel(%arg0: i32, %arg1: memref<8x512xf32, #tpu.memory_space<vmem>>, %arg2: memref<27x8x384xf32, #tpu.memory_space<vmem>>, %arg3: memref<3xf32, #tpu.memory_space<smem>>, %arg4: memref<6x384xf32, #tpu.memory_space<vmem>>) attributes {dimension_semantics = [#tpu.dimension_semantics<arbitrary>], iteration_bounds = array<i64: 1>, scalar_prefetch = 0 : i64, scratch_operands = 0 : i64, tpu.core_type = #tpu.core_type<tc>, window_params = [{pipeline_mode = #tpu.pipeline_mode<synchronous>, transform_indices = @transform_0, window_bounds = array<i64: 8, 512>}, {pipeline_mode = #tpu.pipeline_mode<synchronous>, transform_indices = @transform_1, window_bounds = array<i64: 27, 8, 384>}, {transform_indices = @transform_2, window_bounds = array<i64: 3>}, {pipeline_mode = #tpu.pipeline_mode<synchronous>, transform_indices = @transform_3, window_bounds = array<i64: 6, 384>}]} {
    %c0 = arith.constant 0 : index
    %c0_0 = arith.constant 0 : index
    %0 = vector.load %arg1[%c0, %c0_0] : memref<8x512xf32, #tpu.memory_space<vmem>>, vector<8x384xf32>
    %c0_1 = arith.constant 0 : index
    %c1 = arith.constant 1 : index
    %1 = vector.load %arg1[%c0_1, %c1] : memref<8x512xf32, #tpu.memory_space<vmem>>, vector<8x384xf32>
    %c0_2 = arith.constant 0 : index
    %c2 = arith.constant 2 : index
    %2 = vector.load %arg1[%c0_2, %c2] : memref<8x512xf32, #tpu.memory_space<vmem>>, vector<8x384xf32>
    %c0_3 = arith.constant 0 : index
    %c18 = arith.constant 18 : index
    %3 = vector.load %arg1[%c0_3, %c18] : memref<8x512xf32, #tpu.memory_space<vmem>>, vector<8x384xf32>
    %c0_4 = arith.constant 0 : index
    %c19 = arith.constant 19 : index
    %4 = vector.load %arg1[%c0_4, %c19] : memref<8x512xf32, #tpu.memory_space<vmem>>, vector<8x384xf32>
    %c0_5 = arith.constant 0 : index
    %c20 = arith.constant 20 : index
    %5 = vector.load %arg1[%c0_5, %c20] : memref<8x512xf32, #tpu.memory_space<vmem>>, vector<8x384xf32>
    %c0_6 = arith.constant 0 : index
    %c36 = arith.constant 36 : index
    %6 = vector.load %arg1[%c0_6, %c36] : memref<8x512xf32, #tpu.memory_space<vmem>>, vector<8x384xf32>
    %c0_7 = arith.constant 0 : index
    %c37 = arith.constant 37 : index
    %7 = vector.load %arg1[%c0_7, %c37] : memref<8x512xf32, #tpu.memory_space<vmem>>, vector<8x384xf32>
    %c0_8 = arith.constant 0 : index
    %c38 = arith.constant 38 : index
    %8 = vector.load %arg1[%c0_8, %c38] : memref<8x512xf32, #tpu.memory_space<vmem>>, vector<8x384xf32>
    %9 = tpu.iota {dimensions = array<i32: 0>} : vector<6x1xi32>
    %cst = arith.constant 0.000000e+00 : f32
    %10 = vector.broadcast %cst : f32 to vector<6x384xf32>
    %c0_9 = arith.constant 0 : index
    %c0_10 = arith.constant 0 : index
    %c0_11 = arith.constant 0 : index
    %11 = vector.load %arg2[%c0_9, %c0_10, %c0_11] : memref<27x8x384xf32, #tpu.memory_space<vmem>>, vector<1x8x384xf32>
    %12 = vector.shape_cast %11 : vector<1x8x384xf32> to vector<8x384xf32>
    %13 = arith.mulf %0, %12 : vector<8x384xf32>
    %c1_12 = arith.constant 1 : index
    %c0_13 = arith.constant 0 : index
    %c0_14 = arith.constant 0 : index
    %14 = vector.load %arg2[%c1_12, %c0_13, %c0_14] : memref<27x8x384xf32, #tpu.memory_space<vmem>>, vector<1x8x384xf32>
    %15 = vector.shape_cast %14 : vector<1x8x384xf32> to vector<8x384xf32>
    %16 = arith.mulf %1, %15 : vector<8x384xf32>
    %17 = arith.addf %13, %16 : vector<8x384xf32>
    %c2_15 = arith.constant 2 : index
    %c0_16 = arith.constant 0 : index
    %c0_17 = arith.constant 0 : index
    %18 = vector.load %arg2[%c2_15, %c0_16, %c0_17] : memref<27x8x384xf32, #tpu.memory_space<vmem>>, vector<1x8x384xf32>
    %19 = vector.shape_cast %18 : vector<1x8x384xf32> to vector<8x384xf32>
    %20 = arith.mulf %2, %19 : vector<8x384xf32>
    %21 = arith.addf %17, %20 : vector<8x384xf32>
    %c3 = arith.constant 3 : index
    %c0_18 = arith.constant 0 : index
    %c0_19 = arith.constant 0 : index
    %22 = vector.load %arg2[%c3, %c0_18, %c0_19] : memref<27x8x384xf32, #tpu.memory_space<vmem>>, vector<1x8x384xf32>
    %23 = vector.shape_cast %22 : vector<1x8x384xf32> to vector<8x384xf32>
    %24 = arith.mulf %3, %23 : vector<8x384xf32>
    %25 = arith.addf %21, %24 : vector<8x384xf32>
    %c4 = arith.constant 4 : index
    %c0_20 = arith.constant 0 : index
    %c0_21 = arith.constant 0 : index
    %26 = vector.load %arg2[%c4, %c0_20, %c0_21] : memref<27x8x384xf32, #tpu.memory_space<vmem>>, vector<1x8x384xf32>
    %27 = vector.shape_cast %26 : vector<1x8x384xf32> to vector<8x384xf32>
    %28 = arith.mulf %4, %27 : vector<8x384xf32>
    %29 = arith.addf %25, %28 : vector<8x384xf32>
    %c5 = arith.constant 5 : index
    %c0_22 = arith.constant 0 : index
    %c0_23 = arith.constant 0 : index
    %30 = vector.load %arg2[%c5, %c0_22, %c0_23] : memref<27x8x384xf32, #tpu.memory_space<vmem>>, vector<1x8x384xf32>
    %31 = vector.shape_cast %30 : vector<1x8x384xf32> to vector<8x384xf32>
    %32 = arith.mulf %5, %31 : vector<8x384xf32>
    %33 = arith.addf %29, %32 : vector<8x384xf32>
    %c6 = arith.constant 6 : index
    %c0_24 = arith.constant 0 : index
    %c0_25 = arith.constant 0 : index
    %34 = vector.load %arg2[%c6, %c0_24, %c0_25] : memref<27x8x384xf32, #tpu.memory_space<vmem>>, vector<1x8x384xf32>
    %35 = vector.shape_cast %34 : vector<1x8x384xf32> to vector<8x384xf32>
    %36 = arith.mulf %6, %35 : vector<8x384xf32>
    %37 = arith.addf %33, %36 : vector<8x384xf32>
    %c7 = arith.constant 7 : index
    %c0_26 = arith.constant 0 : index
    %c0_27 = arith.constant 0 : index
    %38 = vector.load %arg2[%c7, %c0_26, %c0_27] : memref<27x8x384xf32, #tpu.memory_space<vmem>>, vector<1x8x384xf32>
    %39 = vector.shape_cast %38 : vector<1x8x384xf32> to vector<8x384xf32>
    %40 = arith.mulf %7, %39 : vector<8x384xf32>
    %41 = arith.addf %37, %40 : vector<8x384xf32>
    %c8 = arith.constant 8 : index
    %c0_28 = arith.constant 0 : index
    %c0_29 = arith.constant 0 : index
    %42 = vector.load %arg2[%c8, %c0_28, %c0_29] : memref<27x8x384xf32, #tpu.memory_space<vmem>>, vector<1x8x384xf32>
    %43 = vector.shape_cast %42 : vector<1x8x384xf32> to vector<8x384xf32>
    %44 = arith.mulf %8, %43 : vector<8x384xf32>
    %45 = arith.addf %41, %44 : vector<8x384xf32>
    %c0_30 = arith.constant 0 : index
    %46 = memref.load %arg3[%c0_30] : memref<3xf32, #tpu.memory_space<smem>>
    %47 = vector.extract_strided_slice %45 {offsets = [0, 0], sizes = [4, 384], strides = [1, 1]} : vector<8x384xf32> to vector<4x384xf32>
    %cst_31 = arith.constant dense<0.000000e+00> : vector<384xf32>
    %48 = vector.multi_reduction <add>, %47, %cst_31 [0] : vector<4x384xf32> to vector<384xf32>
    %49 = vector.shape_cast %48 : vector<384xf32> to vector<1x384xf32>
    %50 = vector.broadcast %46 : f32 to vector<1x384xf32>
    %51 = arith.addf %49, %50 : vector<1x384xf32>
    %c0_i32 = arith.constant 0 : i32
    %52 = vector.broadcast %c0_i32 : i32 to vector<6x1xi32>
    %53 = arith.cmpi eq, %9, %52 : vector<6x1xi32>
    %cst_32 = arith.constant 0.000000e+00 : f32
    %54 = vector.shape_cast %53 : vector<6x1xi1> to vector<6x1xi1>
    %55 = vector.broadcast %54 : vector<6x1xi1> to vector<6x384xi1>
    %56 = vector.shape_cast %51 : vector<1x384xf32> to vector<1x384xf32>
    %57 = vector.broadcast %56 : vector<1x384xf32> to vector<6x384xf32>
    %58 = vector.broadcast %cst_32 : f32 to vector<6x384xf32>
    %59 = arith.select %55, %57, %58 : vector<6x384xi1>, vector<6x384xf32>
    %60 = arith.addf %10, %59 : vector<6x384xf32>
    %61 = vector.extract_strided_slice %45 {offsets = [4, 0], sizes = [4, 384], strides = [1, 1]} : vector<8x384xf32> to vector<4x384xf32>
    %cst_33 = arith.constant dense<0.000000e+00> : vector<384xf32>
    %62 = vector.multi_reduction <add>, %61, %cst_33 [0] : vector<4x384xf32> to vector<384xf32>
    %63 = vector.shape_cast %62 : vector<384xf32> to vector<1x384xf32>
    %64 = vector.broadcast %46 : f32 to vector<1x384xf32>
    %65 = arith.addf %63, %64 : vector<1x384xf32>
    %c1_i32 = arith.constant 1 : i32
    %66 = vector.broadcast %c1_i32 : i32 to vector<6x1xi32>
    %67 = arith.cmpi eq, %9, %66 : vector<6x1xi32>
    %cst_34 = arith.constant 0.000000e+00 : f32
    %68 = vector.shape_cast %67 : vector<6x1xi1> to vector<6x1xi1>
    %69 = vector.broadcast %68 : vector<6x1xi1> to vector<6x384xi1>
    %70 = vector.shape_cast %65 : vector<1x384xf32> to vector<1x384xf32>
    %71 = vector.broadcast %70 : vector<1x384xf32> to vector<6x384xf32>
    %72 = vector.broadcast %cst_34 : f32 to vector<6x384xf32>
    %73 = arith.select %69, %71, %72 : vector<6x384xi1>, vector<6x384xf32>
    %74 = arith.addf %60, %73 : vector<6x384xf32>
    %c9 = arith.constant 9 : index
    %c0_35 = arith.constant 0 : index
    %c0_36 = arith.constant 0 : index
    %75 = vector.load %arg2[%c9, %c0_35, %c0_36] : memref<27x8x384xf32, #tpu.memory_space<vmem>>, vector<1x8x384xf32>
    %76 = vector.shape_cast %75 : vector<1x8x384xf32> to vector<8x384xf32>
    %77 = arith.mulf %0, %76 : vector<8x384xf32>
    %c10 = arith.constant 10 : index
    %c0_37 = arith.constant 0 : index
    %c0_38 = arith.constant 0 : index
    %78 = vector.load %arg2[%c10, %c0_37, %c0_38] : memref<27x8x384xf32, #tpu.memory_space<vmem>>, vector<1x8x384xf32>
    %79 = vector.shape_cast %78 : vector<1x8x384xf32> to vector<8x384xf32>
    %80 = arith.mulf %1, %79 : vector<8x384xf32>
    %81 = arith.addf %77, %80 : vector<8x384xf32>
    %c11 = arith.constant 11 : index
    %c0_39 = arith.constant 0 : index
    %c0_40 = arith.constant 0 : index
    %82 = vector.load %arg2[%c11, %c0_39, %c0_40] : memref<27x8x384xf32, #tpu.memory_space<vmem>>, vector<1x8x384xf32>
    %83 = vector.shape_cast %82 : vector<1x8x384xf32> to vector<8x384xf32>
    %84 = arith.mulf %2, %83 : vector<8x384xf32>
    %85 = arith.addf %81, %84 : vector<8x384xf32>
    %c12 = arith.constant 12 : index
    %c0_41 = arith.constant 0 : index
    %c0_42 = arith.constant 0 : index
    %86 = vector.load %arg2[%c12, %c0_41, %c0_42] : memref<27x8x384xf32, #tpu.memory_space<vmem>>, vector<1x8x384xf32>
    %87 = vector.shape_cast %86 : vector<1x8x384xf32> to vector<8x384xf32>
    %88 = arith.mulf %3, %87 : vector<8x384xf32>
    %89 = arith.addf %85, %88 : vector<8x384xf32>
    %c13 = arith.constant 13 : index
    %c0_43 = arith.constant 0 : index
    %c0_44 = arith.constant 0 : index
    %90 = vector.load %arg2[%c13, %c0_43, %c0_44] : memref<27x8x384xf32, #tpu.memory_space<vmem>>, vector<1x8x384xf32>
    %91 = vector.shape_cast %90 : vector<1x8x384xf32> to vector<8x384xf32>
    %92 = arith.mulf %4, %91 : vector<8x384xf32>
    %93 = arith.addf %89, %92 : vector<8x384xf32>
    %c14 = arith.constant 14 : index
    %c0_45 = arith.constant 0 : index
    %c0_46 = arith.constant 0 : index
    %94 = vector.load %arg2[%c14, %c0_45, %c0_46] : memref<27x8x384xf32, #tpu.memory_space<vmem>>, vector<1x8x384xf32>
    %95 = vector.shape_cast %94 : vector<1x8x384xf32> to vector<8x384xf32>
    %96 = arith.mulf %5, %95 : vector<8x384xf32>
    %97 = arith.addf %93, %96 : vector<8x384xf32>
    %c15 = arith.constant 15 : index
    %c0_47 = arith.constant 0 : index
    %c0_48 = arith.constant 0 : index
    %98 = vector.load %arg2[%c15, %c0_47, %c0_48] : memref<27x8x384xf32, #tpu.memory_space<vmem>>, vector<1x8x384xf32>
    %99 = vector.shape_cast %98 : vector<1x8x384xf32> to vector<8x384xf32>
    %100 = arith.mulf %6, %99 : vector<8x384xf32>
    %101 = arith.addf %97, %100 : vector<8x384xf32>
    %c16 = arith.constant 16 : index
    %c0_49 = arith.constant 0 : index
    %c0_50 = arith.constant 0 : index
    %102 = vector.load %arg2[%c16, %c0_49, %c0_50] : memref<27x8x384xf32, #tpu.memory_space<vmem>>, vector<1x8x384xf32>
    %103 = vector.shape_cast %102 : vector<1x8x384xf32> to vector<8x384xf32>
    %104 = arith.mulf %7, %103 : vector<8x384xf32>
    %105 = arith.addf %101, %104 : vector<8x384xf32>
    %c17 = arith.constant 17 : index
    %c0_51 = arith.constant 0 : index
    %c0_52 = arith.constant 0 : index
    %106 = vector.load %arg2[%c17, %c0_51, %c0_52] : memref<27x8x384xf32, #tpu.memory_space<vmem>>, vector<1x8x384xf32>
    %107 = vector.shape_cast %106 : vector<1x8x384xf32> to vector<8x384xf32>
    %108 = arith.mulf %8, %107 : vector<8x384xf32>
    %109 = arith.addf %105, %108 : vector<8x384xf32>
    %c1_53 = arith.constant 1 : index
    %110 = memref.load %arg3[%c1_53] : memref<3xf32, #tpu.memory_space<smem>>
    %111 = vector.extract_strided_slice %109 {offsets = [0, 0], sizes = [4, 384], strides = [1, 1]} : vector<8x384xf32> to vector<4x384xf32>
    %cst_54 = arith.constant dense<0.000000e+00> : vector<384xf32>
    %112 = vector.multi_reduction <add>, %111, %cst_54 [0] : vector<4x384xf32> to vector<384xf32>
    %113 = vector.shape_cast %112 : vector<384xf32> to vector<1x384xf32>
    %114 = vector.broadcast %110 : f32 to vector<1x384xf32>
    %115 = arith.addf %113, %114 : vector<1x384xf32>
    %c2_i32 = arith.constant 2 : i32
    %116 = vector.broadcast %c2_i32 : i32 to vector<6x1xi32>
    %117 = arith.cmpi eq, %9, %116 : vector<6x1xi32>
    %cst_55 = arith.constant 0.000000e+00 : f32
    %118 = vector.shape_cast %117 : vector<6x1xi1> to vector<6x1xi1>
    %119 = vector.broadcast %118 : vector<6x1xi1> to vector<6x384xi1>
    %120 = vector.shape_cast %115 : vector<1x384xf32> to vector<1x384xf32>
    %121 = vector.broadcast %120 : vector<1x384xf32> to vector<6x384xf32>
    %122 = vector.broadcast %cst_55 : f32 to vector<6x384xf32>
    %123 = arith.select %119, %121, %122 : vector<6x384xi1>, vector<6x384xf32>
    %124 = arith.addf %74, %123 : vector<6x384xf32>
    %125 = vector.extract_strided_slice %109 {offsets = [4, 0], sizes = [4, 384], strides = [1, 1]} : vector<8x384xf32> to vector<4x384xf32>
    %cst_56 = arith.constant dense<0.000000e+00> : vector<384xf32>
    %126 = vector.multi_reduction <add>, %125, %cst_56 [0] : vector<4x384xf32> to vector<384xf32>
    %127 = vector.shape_cast %126 : vector<384xf32> to vector<1x384xf32>
    %128 = vector.broadcast %110 : f32 to vector<1x384xf32>
    %129 = arith.addf %127, %128 : vector<1x384xf32>
    %c3_i32 = arith.constant 3 : i32
    %130 = vector.broadcast %c3_i32 : i32 to vector<6x1xi32>
    %131 = arith.cmpi eq, %9, %130 : vector<6x1xi32>
    %cst_57 = arith.constant 0.000000e+00 : f32
    %132 = vector.shape_cast %131 : vector<6x1xi1> to vector<6x1xi1>
    %133 = vector.broadcast %132 : vector<6x1xi1> to vector<6x384xi1>
    %134 = vector.shape_cast %129 : vector<1x384xf32> to vector<1x384xf32>
    %135 = vector.broadcast %134 : vector<1x384xf32> to vector<6x384xf32>
    %136 = vector.broadcast %cst_57 : f32 to vector<6x384xf32>
    %137 = arith.select %133, %135, %136 : vector<6x384xi1>, vector<6x384xf32>
    %138 = arith.addf %124, %137 : vector<6x384xf32>
    %c18_58 = arith.constant 18 : index
    %c0_59 = arith.constant 0 : index
    %c0_60 = arith.constant 0 : index
    %139 = vector.load %arg2[%c18_58, %c0_59, %c0_60] : memref<27x8x384xf32, #tpu.memory_space<vmem>>, vector<1x8x384xf32>
    %140 = vector.shape_cast %139 : vector<1x8x384xf32> to vector<8x384xf32>
    %141 = arith.mulf %0, %140 : vector<8x384xf32>
    %c19_61 = arith.constant 19 : index
    %c0_62 = arith.constant 0 : index
    %c0_63 = arith.constant 0 : index
    %142 = vector.load %arg2[%c19_61, %c0_62, %c0_63] : memref<27x8x384xf32, #tpu.memory_space<vmem>>, vector<1x8x384xf32>
    %143 = vector.shape_cast %142 : vector<1x8x384xf32> to vector<8x384xf32>
    %144 = arith.mulf %1, %143 : vector<8x384xf32>
    %145 = arith.addf %141, %144 : vector<8x384xf32>
    %c20_64 = arith.constant 20 : index
    %c0_65 = arith.constant 0 : index
    %c0_66 = arith.constant 0 : index
    %146 = vector.load %arg2[%c20_64, %c0_65, %c0_66] : memref<27x8x384xf32, #tpu.memory_space<vmem>>, vector<1x8x384xf32>
    %147 = vector.shape_cast %146 : vector<1x8x384xf32> to vector<8x384xf32>
    %148 = arith.mulf %2, %147 : vector<8x384xf32>
    %149 = arith.addf %145, %148 : vector<8x384xf32>
    %c21 = arith.constant 21 : index
    %c0_67 = arith.constant 0 : index
    %c0_68 = arith.constant 0 : index
    %150 = vector.load %arg2[%c21, %c0_67, %c0_68] : memref<27x8x384xf32, #tpu.memory_space<vmem>>, vector<1x8x384xf32>
    %151 = vector.shape_cast %150 : vector<1x8x384xf32> to vector<8x384xf32>
    %152 = arith.mulf %3, %151 : vector<8x384xf32>
    %153 = arith.addf %149, %152 : vector<8x384xf32>
    %c22 = arith.constant 22 : index
    %c0_69 = arith.constant 0 : index
    %c0_70 = arith.constant 0 : index
    %154 = vector.load %arg2[%c22, %c0_69, %c0_70] : memref<27x8x384xf32, #tpu.memory_space<vmem>>, vector<1x8x384xf32>
    %155 = vector.shape_cast %154 : vector<1x8x384xf32> to vector<8x384xf32>
    %156 = arith.mulf %4, %155 : vector<8x384xf32>
    %157 = arith.addf %153, %156 : vector<8x384xf32>
    %c23 = arith.constant 23 : index
    %c0_71 = arith.constant 0 : index
    %c0_72 = arith.constant 0 : index
    %158 = vector.load %arg2[%c23, %c0_71, %c0_72] : memref<27x8x384xf32, #tpu.memory_space<vmem>>, vector<1x8x384xf32>
    %159 = vector.shape_cast %158 : vector<1x8x384xf32> to vector<8x384xf32>
    %160 = arith.mulf %5, %159 : vector<8x384xf32>
    %161 = arith.addf %157, %160 : vector<8x384xf32>
    %c24 = arith.constant 24 : index
    %c0_73 = arith.constant 0 : index
    %c0_74 = arith.constant 0 : index
    %162 = vector.load %arg2[%c24, %c0_73, %c0_74] : memref<27x8x384xf32, #tpu.memory_space<vmem>>, vector<1x8x384xf32>
    %163 = vector.shape_cast %162 : vector<1x8x384xf32> to vector<8x384xf32>
    %164 = arith.mulf %6, %163 : vector<8x384xf32>
    %165 = arith.addf %161, %164 : vector<8x384xf32>
    %c25 = arith.constant 25 : index
    %c0_75 = arith.constant 0 : index
    %c0_76 = arith.constant 0 : index
    %166 = vector.load %arg2[%c25, %c0_75, %c0_76] : memref<27x8x384xf32, #tpu.memory_space<vmem>>, vector<1x8x384xf32>
    %167 = vector.shape_cast %166 : vector<1x8x384xf32> to vector<8x384xf32>
    %168 = arith.mulf %7, %167 : vector<8x384xf32>
    %169 = arith.addf %165, %168 : vector<8x384xf32>
    %c26 = arith.constant 26 : index
    %c0_77 = arith.constant 0 : index
    %c0_78 = arith.constant 0 : index
    %170 = vector.load %arg2[%c26, %c0_77, %c0_78] : memref<27x8x384xf32, #tpu.memory_space<vmem>>, vector<1x8x384xf32>
    %171 = vector.shape_cast %170 : vector<1x8x384xf32> to vector<8x384xf32>
    %172 = arith.mulf %8, %171 : vector<8x384xf32>
    %173 = arith.addf %169, %172 : vector<8x384xf32>
    %c2_79 = arith.constant 2 : index
    %174 = memref.load %arg3[%c2_79] : memref<3xf32, #tpu.memory_space<smem>>
    %175 = vector.extract_strided_slice %173 {offsets = [0, 0], sizes = [4, 384], strides = [1, 1]} : vector<8x384xf32> to vector<4x384xf32>
    %cst_80 = arith.constant dense<0.000000e+00> : vector<384xf32>
    %176 = vector.multi_reduction <add>, %175, %cst_80 [0] : vector<4x384xf32> to vector<384xf32>
    %177 = vector.shape_cast %176 : vector<384xf32> to vector<1x384xf32>
    %178 = vector.broadcast %174 : f32 to vector<1x384xf32>
    %179 = arith.addf %177, %178 : vector<1x384xf32>
    %c4_i32 = arith.constant 4 : i32
    %180 = vector.broadcast %c4_i32 : i32 to vector<6x1xi32>
    %181 = arith.cmpi eq, %9, %180 : vector<6x1xi32>
    %cst_81 = arith.constant 0.000000e+00 : f32
    %182 = vector.shape_cast %181 : vector<6x1xi1> to vector<6x1xi1>
    %183 = vector.broadcast %182 : vector<6x1xi1> to vector<6x384xi1>
    %184 = vector.shape_cast %179 : vector<1x384xf32> to vector<1x384xf32>
    %185 = vector.broadcast %184 : vector<1x384xf32> to vector<6x384xf32>
    %186 = vector.broadcast %cst_81 : f32 to vector<6x384xf32>
    %187 = arith.select %183, %185, %186 : vector<6x384xi1>, vector<6x384xf32>
    %188 = arith.addf %138, %187 : vector<6x384xf32>
    %189 = vector.extract_strided_slice %173 {offsets = [4, 0], sizes = [4, 384], strides = [1, 1]} : vector<8x384xf32> to vector<4x384xf32>
    %cst_82 = arith.constant dense<0.000000e+00> : vector<384xf32>
    %190 = vector.multi_reduction <add>, %189, %cst_82 [0] : vector<4x384xf32> to vector<384xf32>
    %191 = vector.shape_cast %190 : vector<384xf32> to vector<1x384xf32>
    %192 = vector.broadcast %174 : f32 to vector<1x384xf32>
    %193 = arith.addf %191, %192 : vector<1x384xf32>
    %c5_i32 = arith.constant 5 : i32
    %194 = vector.broadcast %c5_i32 : i32 to vector<6x1xi32>
    %195 = arith.cmpi eq, %9, %194 : vector<6x1xi32>
    %cst_83 = arith.constant 0.000000e+00 : f32
    %196 = vector.shape_cast %195 : vector<6x1xi1> to vector<6x1xi1>
    %197 = vector.broadcast %196 : vector<6x1xi1> to vector<6x384xi1>
    %198 = vector.shape_cast %193 : vector<1x384xf32> to vector<1x384xf32>
    %199 = vector.broadcast %198 : vector<1x384xf32> to vector<6x384xf32>
    %200 = vector.broadcast %cst_83 : f32 to vector<6x384xf32>
    %201 = arith.select %197, %199, %200 : vector<6x384xi1>, vector<6x384xf32>
    %202 = arith.addf %188, %201 : vector<6x384xf32>
    %203 = math.tanh %202 : vector<6x384xf32>
    %c0_84 = arith.constant 0 : index
    %c0_85 = arith.constant 0 : index
    %204 = vector.load %arg4[%c0_84, %c0_85] : memref<6x384xf32, #tpu.memory_space<vmem>>, vector<6x384xf32>
    tpu.vector_store %arg4[%c0_84, %c0_85], %203 {strides = array<i32>} : memref<6x384xf32, #tpu.memory_space<vmem>>, vector<6x384xf32>,
    return
  }
  func.func @transform_0(%arg0: i32) -> (i32, i32) {
    %c0_i32 = arith.constant 0 : i32
    %c0_i32_0 = arith.constant 0 : i32
    %c0_i32_1 = arith.constant 0 : i32
    return %c0_i32, %c0_i32_0 : i32, i32
  }
  func.func @transform_1(%arg0: i32) -> (i32, i32, i32) {
    %c0_i32 = arith.constant 0 : i32
    %c0_i32_0 = arith.constant 0 : i32
    %c0_i32_1 = arith.constant 0 : i32
    %c0_i32_2 = arith.constant 0 : i32
    return %c0_i32, %c0_i32_0, %c0_i32_1 : i32, i32, i32
  }
  func.func @transform_2(%arg0: i32) -> i32 {
    %c0_i32 = arith.constant 0 : i32
    %c0_i32_0 = arith.constant 0 : i32
    return %c0_i32 : i32
  }
  func.func @transform_3(%arg0: i32) -> (i32, i32) {
    %c0_i32 = arith.constant 0 : i32
    %c0_i32_0 = arith.constant 0 : i32
    %c0_i32_1 = arith.constant 0 : i32
    return %c0_i32, %c0_i32_0 : i32, i32
  }
}

</mosaic_0001>

<llo_original>
// kernel: tpu_custom_call.1
$region0: #{tpu_custom_call.1}
  #allocation0 [shape = 'u32[]', space=smem, size = 0x4, offset = 0x4, fixed_abs, tag = 'smem constant byte address 0x4 - core index']
  #allocation1 [shape = 'u32[72,128]{1,0:T(1,128)}', space=vmem, size = 0x9000, scoped, tag = 'internal scratch']
  %s0 = inlined_call_operand.hbm [shape: f32[8,512], index: 0, kind: input, shape index: {}]
  %s1 = inlined_call_operand.hbm [shape: f32[27,8,384], index: 1, kind: input, shape index: {}]
  %s2 = inlined_call_operand.vmem [shape: f32[3], index: 2, kind: input, shape index: {}]
  %s3 = inlined_call_operand.hbm [shape: f32[6,384], index: 3, kind: output, shape index: {}]
  %s4 = sld [smem:[#allocation0]]
  $region34: #{tpu_custom_call.1} parent=0
    _
  %s6 = ssub.s32 1, %s4
  %s7 = scalar_select 0, %s6, %s4
  $region1: #{tpu_custom_call.1} parent=0
    #allocation2 [shape = 'u8[16384]{0}', space=vmem, size = 0x4000, scoped, tag = 'input window, operand 0, single buffered']
    #allocation3 [shape = 's32[1]{0}', space=sflag, size = 0x4, scoped, tag = 'scoped memory for tpu_custom_call.1']
    #allocation4 [shape = 's32[1]{0}', space=sflag, size = 0x4, scoped, tag = 'scoped memory for tpu_custom_call.1']
    #allocation5 [shape = 's32[1]{0}', space=sflag, size = 0x4, scoped, tag = 'scoped memory for tpu_custom_call.1']
    #allocation6 [shape = 'u8[331776]{0}', space=vmem, size = 0x51000, scoped, tag = 'input window, operand 1, single buffered']
    #allocation7 [shape = 's32[1]{0}', space=sflag, size = 0x4, scoped, tag = 'scoped memory for tpu_custom_call.1']
    #allocation8 [shape = 'u8[512]{0}', space=smem, size = 0x200, scoped, tag = 'input window, operand 2, single buffered']
    #allocation9 [shape = 'u8[12288]{0}', space=vmem, size = 0x3000, scoped, tag = 'output window, operand 0, single buffered']
    %8 = vsyncpa [#allocation3], 0
    %9 = vsyncpa [#allocation7], 0
    %10 = vsyncpa [#allocation5], 0
    %11 = vsyncpa [#allocation4], 0
    // Predicated region
    $region2: #{tpu_custom_call.1} parent=1 // pred_check
      _
    $region3: #{tpu_custom_call.1} parent=1 // pred_check_branch
      %13 = sbr.rel (0) target = $region5
    $region4: #{tpu_custom_call.1} parent=1 // pred_region
      %15 = vsyncadd [#allocation3], 0
      %s17 = sshll.u32 %s0, 4
      %s18 = int_to_ptr.hbm [resolvable:$true] %s17
      %s19 = sshll.u32 [#allocation2], 4
      %s20 = int_to_ptr.vmem [resolvable:$true] %s19
      %22 = dma.hbm_to_vmem [thread:$0]  %s18, 512, %s20, [#allocation3]
    $region5: #{tpu_custom_call.1} parent=1 // pred_fallthru
      _
    // Predicated region
    $region6: #{tpu_custom_call.1} parent=1 // pred_check
      _
    $region7: #{tpu_custom_call.1} parent=1 // pred_check_branch
      %24 = sbr.rel (0) target = $region9
    $region8: #{tpu_custom_call.1} parent=1 // pred_region
      %26 = vsyncadd [#allocation7], 0
      %s27 = sshll.u32 %s1, 4
      %s28 = int_to_ptr.hbm [resolvable:$true] %s27
      %s29 = sshll.u32 [#allocation6], 4
      %s30 = int_to_ptr.vmem [resolvable:$true] %s29
      %35 = dma.hbm_to_vmem [thread:$0]  %s28, 10368, %s30, [#allocation7], 384, 384, 24
    $region9: #{tpu_custom_call.1} parent=1 // pred_fallthru
      _
    // Predicated region
    $region10: #{tpu_custom_call.1} parent=1 // pred_check
      _
    $region11: #{tpu_custom_call.1} parent=1 // pred_check_branch
      %37 = sbr.rel (0) target = $region13
    $region12: #{tpu_custom_call.1} parent=1 // pred_region
      %39 = vsyncadd [#allocation5], 0
      %s41 = sshll.u32 %s2, 4
      %s42 = int_to_ptr.vmem [resolvable:$true] %s41
      %44 = dma.vmem_to_smem %s42, 16, [#allocation8], [#allocation5]
    $region13: #{tpu_custom_call.1} parent=1 // pred_fallthru
      _
    // Predicated region
    $region14: #{tpu_custom_call.1} parent=1 // pred_check
      _
    $region15: #{tpu_custom_call.1} parent=1 // pred_check_branch
      %46 = sbr.rel (0) target = $region17
    $region16: #{tpu_custom_call.1} parent=1 // pred_region
      %48 = dma.done [#allocation3], 512
    $region17: #{tpu_custom_call.1} parent=1 // pred_fallthru
      _
    // Predicated region
    $region18: #{tpu_custom_call.1} parent=1 // pred_check
      _
    $region19: #{tpu_custom_call.1} parent=1 // pred_check_branch
      %50 = sbr.rel (0) target = $region21
    $region20: #{tpu_custom_call.1} parent=1 // pred_region
      %52 = dma.done [#allocation7], 10368
    $region21: #{tpu_custom_call.1} parent=1 // pred_fallthru
      _
    // Predicated region
    $region22: #{tpu_custom_call.1} parent=1 // pred_check
      _
    $region23: #{tpu_custom_call.1} parent=1 // pred_check_branch
      %54 = sbr.rel (0) target = $region25
    $region24: #{tpu_custom_call.1} parent=1 // pred_region
      %56 = dma.done [#allocation5], 16
    $region25: #{tpu_custom_call.1} parent=1 // pred_fallthru
      _
    %57 = sfence
    %v58 = vld [vmem:[#allocation2] sm:$0xff]
    %v59 = vld [vmem:[#allocation2 + $0x8] sm:$0xff]
    %v60 = vld [vmem:[#allocation2 + $0x10] sm:$0xff]
    %v61 = vld [vmem:[#allocation2] sm:$0xff]
    %v62 = vld [vmem:[#allocation2 + $0x8] sm:$0xff]
    %v63 = vld [vmem:[#allocation2 + $0x10] sm:$0xff]
    %v64 = vld [vmem:[#allocation2 + $0x18] sm:$0xff]
    %v65 = vlaneseq
    %v66 = vshrl.u32 %v65, 7
    %v67 = vld [vmem:[#allocation6] sm:$0xff]
    %v68 = vld [vmem:[#allocation6 + $0x8] sm:$0xff]
    %v69 = vld [vmem:[#allocation6 + $0x10] sm:$0xff]
    %v70 = vmul.f32 %v58, %v67
    %v71 = vmul.f32 %v59, %v68
    %v72 = vmul.f32 %v60, %v69
    %s73 = scalar_lea.vmem [#allocation6], 24
    %v74 = vld [vmem:[%s73] sm:$0xff]
    %v75 = vld [vmem:[%s73 + $0x8] sm:$0xff]
    %v76 = vld [vmem:[%s73 + $0x10] sm:$0xff]
    %80 = vrot.lane.b32.xlu0 %v74, 1
    %v81 = vpop.permute.xlu0 %80
    %82 = vrot.lane.b32.xlu0 %v75, 1
    %v83 = vpop.permute.xlu0 %82
    %84 = vrot.lane.b32.xlu0 %v76, 1
    %v85 = vpop.permute.xlu0 %84
    %vm86 = vcmask 7168
    %v87 = vsel %vm86, %v81, %v83
    %v88 = vsel %vm86, %v83, %v85
    %v93 = vmul.f32 %v61, %v81
    %v94 = vmul.f32 %v62, %v87
    %v95 = vmul.f32 %v63, %v88
    %v96 = vmul.f32 %v64, %v85
    %101 = vrot.lane.b32.xlu0 %v93, 127
    %v102 = vpop.permute.xlu0 %101
    %103 = vrot.lane.b32.xlu0 %v94, 127
    %v104 = vpop.permute.xlu0 %103
    %105 = vrot.lane.b32.xlu0 %v95, 127
    %v106 = vpop.permute.xlu0 %105
    %107 = vrot.lane.b32.xlu0 %v96, 127
    %v108 = vpop.permute.xlu0 %107
    %vm109 = vcmask 1039360
    %v110 = vsel %vm109, %v102, %v104
    %v111 = vsel %vm109, %v104, %v106
    %v112 = vsel %vm109, %v106, %v108
    %v116 = vadd.f32 %v70, %v110
    %v117 = vadd.f32 %v71, %v111
    %v118 = vadd.f32 %v72, %v112
    %s119 = scalar_lea.vmem [#allocation6], 48
    %v120 = vld [vmem:[%s119] sm:$0xff]
    %v121 = vld [vmem:[%s119 + $0x8] sm:$0xff]
    %v122 = vld [vmem:[%s119 + $0x10] sm:$0xff]
    %126 = vrot.lane.b32.xlu0 %v120, 2
    %v127 = vpop.permute.xlu0 %126
    %128 = vrot.lane.b32.xlu0 %v121, 2
    %v129 = vpop.permute.xlu0 %128
    %130 = vrot.lane.b32.xlu0 %v122, 2
    %v131 = vpop.permute.xlu0 %130
    %vm132 = vcmask 15360
    %v133 = vsel %vm132, %v127, %v129
    %v134 = vsel %vm132, %v129, %v131
    %v139 = vmul.f32 %v61, %v127
    %v140 = vmul.f32 %v62, %v133
    %v141 = vmul.f32 %v63, %v134
    %v142 = vmul.f32 %v64, %v131
    %147 = vrot.lane.b32.xlu0 %v139, 126
    %v148 = vpop.permute.xlu0 %147
    %149 = vrot.lane.b32.xlu0 %v140, 126
    %v150 = vpop.permute.xlu0 %149
    %151 = vrot.lane.b32.xlu0 %v141, 126
    %v152 = vpop.permute.xlu0 %151
    %153 = vrot.lane.b32.xlu0 %v142, 126
    %v154 = vpop.permute.xlu0 %153
    %vm155 = vcmask 1031168
    %v156 = vsel %vm155, %v148, %v150
    %v157 = vsel %vm155, %v150, %v152
    %v158 = vsel %vm155, %v152, %v154
    %v162 = vadd.f32 %v116, %v156
    %v163 = vadd.f32 %v117, %v157
    %v164 = vadd.f32 %v118, %v158
    %s165 = scalar_lea.vmem [#allocation6], 72
    %v166 = vld [vmem:[%s165] sm:$0xff]
    %v167 = vld [vmem:[%s165 + $0x8] sm:$0xff]
    %v168 = vld [vmem:[%s165 + $0x10] sm:$0xff]
    %172 = vrot.lane.b32.xlu0 %v166, 18
    %v173 = vpop.permute.xlu0 %172
    %174 = vrot.lane.b32.xlu0 %v167, 18
    %v175 = vpop.permute.xlu0 %174
    %176 = vrot.lane.b32.xlu0 %v168, 18
    %v177 = vpop.permute.xlu0 %176
    %vm178 = vcmask 146432
    %v179 = vsel %vm178, %v173, %v175
    %v180 = vsel %vm178, %v175, %v177
    %v185 = vmul.f32 %v61, %v173
    %v186 = vmul.f32 %v62, %v179
    %v187 = vmul.f32 %v63, %v180
    %v188 = vmul.f32 %v64, %v177
    %193 = vrot.lane.b32.xlu0 %v185, 110
    %v194 = vpop.permute.xlu0 %193
    %195 = vrot.lane.b32.xlu0 %v186, 110
    %v196 = vpop.permute.xlu0 %195
    %197 = vrot.lane.b32.xlu0 %v187, 110
    %v198 = vpop.permute.xlu0 %197
    %199 = vrot.lane.b32.xlu0 %v188, 110
    %v200 = vpop.permute.xlu0 %199
    %vm201 = vcmask 900096
    %v202 = vsel %vm201, %v194, %v196
    %v203 = vsel %vm201, %v196, %v198
    %v204 = vsel %vm201, %v198, %v200
    %v208 = vadd.f32 %v162, %v202
    %v209 = vadd.f32 %v163, %v203
    %v210 = vadd.f32 %v164, %v204
    %s211 = scalar_lea.vmem [#allocation6], 96
    %v212 = vld [vmem:[%s211] sm:$0xff]
    %v213 = vld [vmem:[%s211 + $0x8] sm:$0xff]
    %v214 = vld [vmem:[%s211 + $0x10] sm:$0xff]
    %218 = vrot.lane.b32.xlu0 %v212, 19
    %v219 = vpop.permute.xlu0 %218
    %220 = vrot.lane.b32.xlu0 %v213, 19
    %v221 = vpop.permute.xlu0 %220
    %222 = vrot.lane.b32.xlu0 %v214, 19
    %v223 = vpop.permute.xlu0 %222
    %vm224 = vcmask 154624
    %v225 = vsel %vm224, %v219, %v221
    %v226 = vsel %vm224, %v221, %v223
    %v231 = vmul.f32 %v61, %v219
    %v232 = vmul.f32 %v62, %v225
    %v233 = vmul.f32 %v63, %v226
    %v234 = vmul.f32 %v64, %v223
    %239 = vrot.lane.b32.xlu0 %v231, 109
    %v240 = vpop.permute.xlu0 %239
    %241 = vrot.lane.b32.xlu0 %v232, 109
    %v242 = vpop.permute.xlu0 %241
    %243 = vrot.lane.b32.xlu0 %v233, 109
    %v244 = vpop.permute.xlu0 %243
    %245 = vrot.lane.b32.xlu0 %v234, 109
    %v246 = vpop.permute.xlu0 %245
    %vm247 = vcmask 891904
    %v248 = vsel %vm247, %v240, %v242
    %v249 = vsel %vm247, %v242, %v244
    %v250 = vsel %vm247, %v244, %v246
    %v254 = vadd.f32 %v208, %v248
    %v255 = vadd.f32 %v209, %v249
    %v256 = vadd.f32 %v210, %v250
    %s257 = scalar_lea.vmem [#allocation6], 120
    %v258 = vld [vmem:[%s257] sm:$0xff]
    %v259 = vld [vmem:[%s257 + $0x8] sm:$0xff]
    %v260 = vld [vmem:[%s257 + $0x10] sm:$0xff]
    %264 = vrot.lane.b32.xlu0 %v258, 20
    %v265 = vpop.permute.xlu0 %264
    %266 = vrot.lane.b32.xlu0 %v259, 20
    %v267 = vpop.permute.xlu0 %266
    %268 = vrot.lane.b32.xlu0 %v260, 20
    %v269 = vpop.permute.xlu0 %268
    %vm270 = vcmask 162816
    %v271 = vsel %vm270, %v265, %v267
    %v272 = vsel %vm270, %v267, %v269
    %v277 = vmul.f32 %v61, %v265
    %v278 = vmul.f32 %v62, %v271
    %v279 = vmul.f32 %v63, %v272
    %v280 = vmul.f32 %v64, %v269
    %285 = vrot.lane.b32.xlu0 %v277, 108
    %v286 = vpop.permute.xlu0 %285
    %287 = vrot.lane.b32.xlu0 %v278, 108
    %v288 = vpop.permute.xlu0 %287
    %289 = vrot.lane.b32.xlu0 %v279, 108
    %v290 = vpop.permute.xlu0 %289
    %291 = vrot.lane.b32.xlu0 %v280, 108
    %v292 = vpop.permute.xlu0 %291
    %vm293 = vcmask 883712
    %v294 = vsel %vm293, %v286, %v288
    %v295 = vsel %vm293, %v288, %v290
    %v296 = vsel %vm293, %v290, %v292
    %v300 = vadd.f32 %v254, %v294
    %v301 = vadd.f32 %v255, %v295
    %v302 = vadd.f32 %v256, %v296
    %s303 = scalar_lea.vmem [#allocation6], 144
    %v304 = vld [vmem:[%s303] sm:$0xff]
    %v305 = vld [vmem:[%s303 + $0x8] sm:$0xff]
    %v306 = vld [vmem:[%s303 + $0x10] sm:$0xff]
    %310 = vrot.lane.b32.xlu0 %v304, 36
    %v311 = vpop.permute.xlu0 %310
    %312 = vrot.lane.b32.xlu0 %v305, 36
    %v313 = vpop.permute.xlu0 %312
    %314 = vrot.lane.b32.xlu0 %v306, 36
    %v315 = vpop.permute.xlu0 %314
    %vm316 = vcmask 293888
    %v317 = vsel %vm316, %v311, %v313
    %v318 = vsel %vm316, %v313, %v315
    %v323 = vmul.f32 %v61, %v311
    %v324 = vmul.f32 %v62, %v317
    %v325 = vmul.f32 %v63, %v318
    %v326 = vmul.f32 %v64, %v315
    %331 = vrot.lane.b32.xlu0 %v323, 92
    %v332 = vpop.permute.xlu0 %331
    %333 = vrot.lane.b32.xlu0 %v324, 92
    %v334 = vpop.permute.xlu0 %333
    %335 = vrot.lane.b32.xlu0 %v325, 92
    %v336 = vpop.permute.xlu0 %335
    %337 = vrot.lane.b32.xlu0 %v326, 92
    %v338 = vpop.permute.xlu0 %337
    %vm339 = vcmask 752640
    %v340 = vsel %vm339, %v332, %v334
    %v341 = vsel %vm339, %v334, %v336
    %v342 = vsel %vm339, %v336, %v338
    %v346 = vadd.f32 %v300, %v340
    %v347 = vadd.f32 %v301, %v341
    %v348 = vadd.f32 %v302, %v342
    %s349 = scalar_lea.vmem [#allocation6], 168
    %v350 = vld [vmem:[%s349] sm:$0xff]
    %v351 = vld [vmem:[%s349 + $0x8] sm:$0xff]
    %v352 = vld [vmem:[%s349 + $0x10] sm:$0xff]
    %356 = vrot.lane.b32.xlu0 %v350, 37
    %v357 = vpop.permute.xlu0 %356
    %358 = vrot.lane.b32.xlu0 %v351, 37
    %v359 = vpop.permute.xlu0 %358
    %360 = vrot.lane.b32.xlu0 %v352, 37
    %v361 = vpop.permute.xlu0 %360
    %vm362 = vcmask 302080
    %v363 = vsel %vm362, %v357, %v359
    %v364 = vsel %vm362, %v359, %v361
    %v369 = vmul.f32 %v61, %v357
    %v370 = vmul.f32 %v62, %v363
    %v371 = vmul.f32 %v63, %v364
    %v372 = vmul.f32 %v64, %v361
    %377 = vrot.lane.b32.xlu0 %v369, 91
    %v378 = vpop.permute.xlu0 %377
    %379 = vrot.lane.b32.xlu0 %v370, 91
    %v380 = vpop.permute.xlu0 %379
    %381 = vrot.lane.b32.xlu0 %v371, 91
    %v382 = vpop.permute.xlu0 %381
    %383 = vrot.lane.b32.xlu0 %v372, 91
    %v384 = vpop.permute.xlu0 %383
    %vm385 = vcmask 744448
    %v386 = vsel %vm385, %v378, %v380
    %v387 = vsel %vm385, %v380, %v382
    %v388 = vsel %vm385, %v382, %v384
    %v392 = vadd.f32 %v346, %v386
    %v393 = vadd.f32 %v347, %v387
    %v394 = vadd.f32 %v348, %v388
    %s395 = scalar_lea.vmem [#allocation6], 192
    %v396 = vld [vmem:[%s395] sm:$0xff]
    %v397 = vld [vmem:[%s395 + $0x8] sm:$0xff]
    %v398 = vld [vmem:[%s395 + $0x10] sm:$0xff]
    %402 = vrot.lane.b32.xlu0 %v396, 38
    %v403 = vpop.permute.xlu0 %402
    %404 = vrot.lane.b32.xlu0 %v397, 38
    %v405 = vpop.permute.xlu0 %404
    %406 = vrot.lane.b32.xlu0 %v398, 38
    %v407 = vpop.permute.xlu0 %406
    %vm408 = vcmask 310272
    %v409 = vsel %vm408, %v403, %v405
    %v410 = vsel %vm408, %v405, %v407
    %v415 = vmul.f32 %v61, %v403
    %v416 = vmul.f32 %v62, %v409
    %v417 = vmul.f32 %v63, %v410
    %v418 = vmul.f32 %v64, %v407
    %423 = vrot.lane.b32.xlu0 %v415, 90
    %v424 = vpop.permute.xlu0 %423
    %425 = vrot.lane.b32.xlu0 %v416, 90
    %v426 = vpop.permute.xlu0 %425
    %427 = vrot.lane.b32.xlu0 %v417, 90
    %v428 = vpop.permute.xlu0 %427
    %429 = vrot.lane.b32.xlu0 %v418, 90
    %v430 = vpop.permute.xlu0 %429
    %vm431 = vcmask 736256
    %v432 = vsel %vm431, %v424, %v426
    %v433 = vsel %vm431, %v426, %v428
    %v434 = vsel %vm431, %v428, %v430
    %v438 = vadd.f32 %v392, %v432
    %v439 = vadd.f32 %v393, %v433
    %v440 = vadd.f32 %v394, %v434
    %s441 = sld [smem:[#allocation8]]
    %vm442 = vcmask 1043456
    %v443 = vsel %vm442, %v438, 0.0
    %v444 = vrot.slane %v443, 4
    %v445 = vadd.f32 %v443, %v444
    %v446 = vrot.slane %v445, 2
    %v447 = vadd.f32 %v445, %v446
    %v448 = vrot.slane %v447, 1
    %v449 = vadd.f32 %v447, %v448
    %v450 = vsel %vm442, %v439, 0.0
    %v451 = vrot.slane %v450, 4
    %v452 = vadd.f32 %v450, %v451
    %v453 = vrot.slane %v452, 2
    %v454 = vadd.f32 %v452, %v453
    %v455 = vrot.slane %v454, 1
    %v456 = vadd.f32 %v454, %v455
    %v457 = vsel %vm442, %v440, 0.0
    %v458 = vrot.slane %v457, 4
    %v459 = vadd.f32 %v457, %v458
    %v460 = vrot.slane %v459, 2
    %v461 = vadd.f32 %v459, %v460
    %v462 = vrot.slane %v461, 1
    %v463 = vadd.f32 %v461, %v462
    %v464 = vstv %s441
    %v465 = vadd.f32 %v449, %v464
    %v466 = vadd.f32 %v456, %v464
    %v467 = vadd.f32 %v463, %v464
    %vm468 = vcmp.eq.s32.totalorder %v66, 0
    %v469 = vsel %vm468, 1, 0
    %vm470 = vcmp.eq.s32.totalorder %v469, 1
    %v471 = vsel %vm470, %v465, 0.0
    %v472 = vsel %vm470, %v466, 0.0
    %v473 = vsel %vm470, %v467, 0.0
    %v474 = vadd.f32 %v471, 0.0
    %v475 = vadd.f32 %v472, 0.0
    %v476 = vadd.f32 %v473, 0.0
    %v480 = vrot.slane %v438, 4
    %v481 = vrot.slane %v439, 4
    %v482 = vrot.slane %v440, 4
    %v486 = vsel %vm442, %v480, 0.0
    %v487 = vrot.slane %v486, 4
    %v488 = vadd.f32 %v486, %v487
    %v489 = vrot.slane %v488, 2
    %v490 = vadd.f32 %v488, %v489
    %v491 = vrot.slane %v490, 1
    %v492 = vadd.f32 %v490, %v491
    %v493 = vsel %vm442, %v481, 0.0
    %v494 = vrot.slane %v493, 4
    %v495 = vadd.f32 %v493, %v494
    %v496 = vrot.slane %v495, 2
    %v497 = vadd.f32 %v495, %v496
    %v498 = vrot.slane %v497, 1
    %v499 = vadd.f32 %v497, %v498
    %v500 = vsel %vm442, %v482, 0.0
    %v501 = vrot.slane %v500, 4
    %v502 = vadd.f32 %v500, %v501
    %v503 = vrot.slane %v502, 2
    %v504 = vadd.f32 %v502, %v503
    %v505 = vrot.slane %v504, 1
    %v506 = vadd.f32 %v504, %v505
    %v507 = vadd.f32 %v492, %v464
    %v508 = vadd.f32 %v499, %v464
    %v509 = vadd.f32 %v506, %v464
    %vm510 = vcmp.eq.s32.totalorder %v66, 1
    %v511 = vsel %vm510, 1, 0
    %vm512 = vcmp.eq.s32.totalorder %v511, 1
    %v513 = vsel %vm512, %v507, 0.0
    %v514 = vsel %vm512, %v508, 0.0
    %v515 = vsel %vm512, %v509, 0.0
    %v516 = vadd.f32 %v474, %v513
    %v517 = vadd.f32 %v475, %v514
    %v518 = vadd.f32 %v476, %v515
    %s519 = scalar_lea.vmem [#allocation6], 216
    %v520 = vld [vmem:[%s519] sm:$0xff]
    %v521 = vld [vmem:[%s519 + $0x8] sm:$0xff]
    %v522 = vld [vmem:[%s519 + $0x10] sm:$0xff]
    %v523 = vmul.f32 %v58, %v520
    %v524 = vmul.f32 %v59, %v521
    %v525 = vmul.f32 %v60, %v522
    %s526 = scalar_lea.vmem [#allocation6], 240
    %v527 = vld [vmem:[%s526] sm:$0xff]
    %v528 = vld [vmem:[%s526 + $0x8] sm:$0xff]
    %v529 = vld [vmem:[%s526 + $0x10] sm:$0xff]
    %533 = vrot.lane.b32.xlu0 %v527, 1
    %v534 = vpop.permute.xlu0 %533
    %535 = vrot.lane.b32.xlu0 %v528, 1
    %v536 = vpop.permute.xlu0 %535
    %537 = vrot.lane.b32.xlu0 %v529, 1
    %v538 = vpop.permute.xlu0 %537
    %v539 = vsel %vm86, %v534, %v536
    %v540 = vsel %vm86, %v536, %v538
    %v545 = vmul.f32 %v61, %v534
    %v546 = vmul.f32 %v62, %v539
    %v547 = vmul.f32 %v63, %v540
    %v548 = vmul.f32 %v64, %v538
    %553 = vrot.lane.b32.xlu0 %v545, 127
    %v554 = vpop.permute.xlu0 %553
    %555 = vrot.lane.b32.xlu0 %v546, 127
    %v556 = vpop.permute.xlu0 %555
    %557 = vrot.lane.b32.xlu0 %v547, 127
    %v558 = vpop.permute.xlu0 %557
    %559 = vrot.lane.b32.xlu0 %v548, 127
    %v560 = vpop.permute.xlu0 %559
    %v561 = vsel %vm109, %v554, %v556
    %v562 = vsel %vm109, %v556, %v558
    %v563 = vsel %vm109, %v558, %v560
    %v567 = vadd.f32 %v523, %v561
    %v568 = vadd.f32 %v524, %v562
    %v569 = vadd.f32 %v525, %v563
    %s570 = scalar_lea.vmem [#allocation6], 264
    %v571 = vld [vmem:[%s570] sm:$0xff]
    %v572 = vld [vmem:[%s570 + $0x8] sm:$0xff]
    %v573 = vld [vmem:[%s570 + $0x10] sm:$0xff]
    %577 = vrot.lane.b32.xlu0 %v571, 2
    %v578 = vpop.permute.xlu0 %577
    %579 = vrot.lane.b32.xlu0 %v572, 2
    %v580 = vpop.permute.xlu0 %579
    %581 = vrot.lane.b32.xlu0 %v573, 2
    %v582 = vpop.permute.xlu0 %581
    %v583 = vsel %vm132, %v578, %v580
    %v584 = vsel %vm132, %v580, %v582
    %v589 = vmul.f32 %v61, %v578
    %v590 = vmul.f32 %v62, %v583
    %v591 = vmul.f32 %v63, %v584
    %v592 = vmul.f32 %v64, %v582
    %597 = vrot.lane.b32.xlu0 %v589, 126
    %v598 = vpop.permute.xlu0 %597
    %599 = vrot.lane.b32.xlu0 %v590, 126
    %v600 = vpop.permute.xlu0 %599
    %601 = vrot.lane.b32.xlu0 %v591, 126
    %v602 = vpop.permute.xlu0 %601
    %603 = vrot.lane.b32.xlu0 %v592, 126
    %v604 = vpop.permute.xlu0 %603
    %v605 = vsel %vm155, %v598, %v600
    %v606 = vsel %vm155, %v600, %v602
    %v607 = vsel %vm155, %v602, %v604
    %v611 = vadd.f32 %v567, %v605
    %v612 = vadd.f32 %v568, %v606
    %v613 = vadd.f32 %v569, %v607
    %s614 = scalar_lea.vmem [#allocation6], 288
    %v615 = vld [vmem:[%s614] sm:$0xff]
    %v616 = vld [vmem:[%s614 + $0x8] sm:$0xff]
    %v617 = vld [vmem:[%s614 + $0x10] sm:$0xff]
    %621 = vrot.lane.b32.xlu0 %v615, 18
    %v622 = vpop.permute.xlu0 %621
    %623 = vrot.lane.b32.xlu0 %v616, 18
    %v624 = vpop.permute.xlu0 %623
    %625 = vrot.lane.b32.xlu0 %v617, 18
    %v626 = vpop.permute.xlu0 %625
    %v627 = vsel %vm178, %v622, %v624
    %v628 = vsel %vm178, %v624, %v626
    %v633 = vmul.f32 %v61, %v622
    %v634 = vmul.f32 %v62, %v627
    %v635 = vmul.f32 %v63, %v628
    %v636 = vmul.f32 %v64, %v626
    %641 = vrot.lane.b32.xlu0 %v633, 110
    %v642 = vpop.permute.xlu0 %641
    %643 = vrot.lane.b32.xlu0 %v634, 110
    %v644 = vpop.permute.xlu0 %643
    %645 = vrot.lane.b32.xlu0 %v635, 110
    %v646 = vpop.permute.xlu0 %645
    %647 = vrot.lane.b32.xlu0 %v636, 110
    %v648 = vpop.permute.xlu0 %647
    %v649 = vsel %vm201, %v642, %v644
    %v650 = vsel %vm201, %v644, %v646
    %v651 = vsel %vm201, %v646, %v648
    %v655 = vadd.f32 %v611, %v649
    %v656 = vadd.f32 %v612, %v650
    %v657 = vadd.f32 %v613, %v651
    %s658 = scalar_lea.vmem [#allocation6], 312
    %v659 = vld [vmem:[%s658] sm:$0xff]
    %v660 = vld [vmem:[%s658 + $0x8] sm:$0xff]
    %v661 = vld [vmem:[%s658 + $0x10] sm:$0xff]
    %665 = vrot.lane.b32.xlu0 %v659, 19
    %v666 = vpop.permute.xlu0 %665
    %667 = vrot.lane.b32.xlu0 %v660, 19
    %v668 = vpop.permute.xlu0 %667
    %669 = vrot.lane.b32.xlu0 %v661, 19
    %v670 = vpop.permute.xlu0 %669
    %v671 = vsel %vm224, %v666, %v668
    %v672 = vsel %vm224, %v668, %v670
    %v677 = vmul.f32 %v61, %v666
    %v678 = vmul.f32 %v62, %v671
    %v679 = vmul.f32 %v63, %v672
    %v680 = vmul.f32 %v64, %v670
    %685 = vrot.lane.b32.xlu0 %v677, 109
    %v686 = vpop.permute.xlu0 %685
    %687 = vrot.lane.b32.xlu0 %v678, 109
    %v688 = vpop.permute.xlu0 %687
    %689 = vrot.lane.b32.xlu0 %v679, 109
    %v690 = vpop.permute.xlu0 %689
    %691 = vrot.lane.b32.xlu0 %v680, 109
    %v692 = vpop.permute.xlu0 %691
    %v693 = vsel %vm247, %v686, %v688
    %v694 = vsel %vm247, %v688, %v690
    %v695 = vsel %vm247, %v690, %v692
    %v699 = vadd.f32 %v655, %v693
    %v700 = vadd.f32 %v656, %v694
    %v701 = vadd.f32 %v657, %v695
    %s702 = scalar_lea.vmem [#allocation6], 336
    %v703 = vld [vmem:[%s702] sm:$0xff]
    %v704 = vld [vmem:[%s702 + $0x8] sm:$0xff]
    %v705 = vld [vmem:[%s702 + $0x10] sm:$0xff]
    %709 = vrot.lane.b32.xlu0 %v703, 20
    %v710 = vpop.permute.xlu0 %709
    %711 = vrot.lane.b32.xlu0 %v704, 20
    %v712 = vpop.permute.xlu0 %711
    %713 = vrot.lane.b32.xlu0 %v705, 20
    %v714 = vpop.permute.xlu0 %713
    %v715 = vsel %vm270, %v710, %v712
    %v716 = vsel %vm270, %v712, %v714
    %v721 = vmul.f32 %v61, %v710
    %v722 = vmul.f32 %v62, %v715
    %v723 = vmul.f32 %v63, %v716
    %v724 = vmul.f32 %v64, %v714
    %729 = vrot.lane.b32.xlu0 %v721, 108
    %v730 = vpop.permute.xlu0 %729
    %731 = vrot.lane.b32.xlu0 %v722, 108
    %v732 = vpop.permute.xlu0 %731
    %733 = vrot.lane.b32.xlu0 %v723, 108
    %v734 = vpop.permute.xlu0 %733
    %735 = vrot.lane.b32.xlu0 %v724, 108
    %v736 = vpop.permute.xlu0 %735
    %v737 = vsel %vm293, %v730, %v732
    %v738 = vsel %vm293, %v732, %v734
    %v739 = vsel %vm293, %v734, %v736
    %v743 = vadd.f32 %v699, %v737
    %v744 = vadd.f32 %v700, %v738
    %v745 = vadd.f32 %v701, %v739
    %s746 = scalar_lea.vmem [#allocation6], 360
    %v747 = vld [vmem:[%s746] sm:$0xff]
    %v748 = vld [vmem:[%s746 + $0x8] sm:$0xff]
    %v749 = vld [vmem:[%s746 + $0x10] sm:$0xff]
    %753 = vrot.lane.b32.xlu0 %v747, 36
    %v754 = vpop.permute.xlu0 %753
    %755 = vrot.lane.b32.xlu0 %v748, 36
    %v756 = vpop.permute.xlu0 %755
    %757 = vrot.lane.b32.xlu0 %v749, 36
    %v758 = vpop.permute.xlu0 %757
    %v759 = vsel %vm316, %v754, %v756
    %v760 = vsel %vm316, %v756, %v758
    %v765 = vmul.f32 %v61, %v754
    %v766 = vmul.f32 %v62, %v759
    %v767 = vmul.f32 %v63, %v760
    %v768 = vmul.f32 %v64, %v758
    %773 = vrot.lane.b32.xlu0 %v765, 92
    %v774 = vpop.permute.xlu0 %773
    %775 = vrot.lane.b32.xlu0 %v766, 92
    %v776 = vpop.permute.xlu0 %775
    %777 = vrot.lane.b32.xlu0 %v767, 92
    %v778 = vpop.permute.xlu0 %777
    %779 = vrot.lane.b32.xlu0 %v768, 92
    %v780 = vpop.permute.xlu0 %779
    %v781 = vsel %vm339, %v774, %v776
    %v782 = vsel %vm339, %v776, %v778
    %v783 = vsel %vm339, %v778, %v780
    %v787 = vadd.f32 %v743, %v781
    %v788 = vadd.f32 %v744, %v782
    %v789 = vadd.f32 %v745, %v783
    %s790 = scalar_lea.vmem [#allocation6], 384
    %v791 = vld [vmem:[%s790] sm:$0xff]
    %v792 = vld [vmem:[%s790 + $0x8] sm:$0xff]
    %v793 = vld [vmem:[%s790 + $0x10] sm:$0xff]
    %797 = vrot.lane.b32.xlu0 %v791, 37
    %v798 = vpop.permute.xlu0 %797
    %799 = vrot.lane.b32.xlu0 %v792, 37
    %v800 = vpop.permute.xlu0 %799
    %801 = vrot.lane.b32.xlu0 %v793, 37
    %v802 = vpop.permute.xlu0 %801
    %v803 = vsel %vm362, %v798, %v800
    %v804 = vsel %vm362, %v800, %v802
    %v809 = vmul.f32 %v61, %v798
    %v810 = vmul.f32 %v62, %v803
    %v811 = vmul.f32 %v63, %v804
    %v812 = vmul.f32 %v64, %v802
    %817 = vrot.lane.b32.xlu0 %v809, 91
    %v818 = vpop.permute.xlu0 %817
    %819 = vrot.lane.b32.xlu0 %v810, 91
    %v820 = vpop.permute.xlu0 %819
    %821 = vrot.lane.b32.xlu0 %v811, 91
    %v822 = vpop.permute.xlu0 %821
    %823 = vrot.lane.b32.xlu0 %v812, 91
    %v824 = vpop.permute.xlu0 %823
    %v825 = vsel %vm385, %v818, %v820
    %v826 = vsel %vm385, %v820, %v822
    %v827 = vsel %vm385, %v822, %v824
    %v831 = vadd.f32 %v787, %v825
    %v832 = vadd.f32 %v788, %v826
    %v833 = vadd.f32 %v789, %v827
    %s834 = scalar_lea.vmem [#allocation6], 408
    %v835 = vld [vmem:[%s834] sm:$0xff]
    %v836 = vld [vmem:[%s834 + $0x8] sm:$0xff]
    %v837 = vld [vmem:[%s834 + $0x10] sm:$0xff]
    %841 = vrot.lane.b32.xlu0 %v835, 38
    %v842 = vpop.permute.xlu0 %841
    %843 = vrot.lane.b32.xlu0 %v836, 38
    %v844 = vpop.permute.xlu0 %843
    %845 = vrot.lane.b32.xlu0 %v837, 38
    %v846 = vpop.permute.xlu0 %845
    %v847 = vsel %vm408, %v842, %v844
    %v848 = vsel %vm408, %v844, %v846
    %v853 = vmul.f32 %v61, %v842
    %v854 = vmul.f32 %v62, %v847
    %v855 = vmul.f32 %v63, %v848
    %v856 = vmul.f32 %v64, %v846
    %861 = vrot.lane.b32.xlu0 %v853, 90
    %v862 = vpop.permute.xlu0 %861
    %863 = vrot.lane.b32.xlu0 %v854, 90
    %v864 = vpop.permute.xlu0 %863
    %865 = vrot.lane.b32.xlu0 %v855, 90
    %v866 = vpop.permute.xlu0 %865
    %867 = vrot.lane.b32.xlu0 %v856, 90
    %v868 = vpop.permute.xlu0 %867
    %v869 = vsel %vm431, %v862, %v864
    %v870 = vsel %vm431, %v864, %v866
    %v871 = vsel %vm431, %v866, %v868
    %v875 = vadd.f32 %v831, %v869
    %v876 = vadd.f32 %v832, %v870
    %v877 = vadd.f32 %v833, %v871
    %s878 = sld [smem:[#allocation8 + $0x1]]
    %v879 = vsel %vm442, %v875, 0.0
    %v880 = vrot.slane %v879, 4
    %v881 = vadd.f32 %v879, %v880
    %v882 = vrot.slane %v881, 2
    %v883 = vadd.f32 %v881, %v882
    %v884 = vrot.slane %v883, 1
    %v885 = vadd.f32 %v883, %v884
    %v886 = vsel %vm442, %v876, 0.0
    %v887 = vrot.slane %v886, 4
    %v888 = vadd.f32 %v886, %v887
    %v889 = vrot.slane %v888, 2
    %v890 = vadd.f32 %v888, %v889
    %v891 = vrot.slane %v890, 1
    %v892 = vadd.f32 %v890, %v891
    %v893 = vsel %vm442, %v877, 0.0
    %v894 = vrot.slane %v893, 4
    %v895 = vadd.f32 %v893, %v894
    %v896 = vrot.slane %v895, 2
    %v897 = vadd.f32 %v895, %v896
    %v898 = vrot.slane %v897, 1
    %v899 = vadd.f32 %v897, %v898
    %v900 = vstv %s878
    %v901 = vadd.f32 %v885, %v900
    %v902 = vadd.f32 %v892, %v900
    %v903 = vadd.f32 %v899, %v900
    %vm904 = vcmp.eq.s32.totalorder %v66, 2
    %v905 = vsel %vm904, 1, 0
    %vm906 = vcmp.eq.s32.totalorder %v905, 1
    %v907 = vsel %vm906, %v901, 0.0
    %v908 = vsel %vm906, %v902, 0.0
    %v909 = vsel %vm906, %v903, 0.0
    %v910 = vadd.f32 %v516, %v907
    %v911 = vadd.f32 %v517, %v908
    %v912 = vadd.f32 %v518, %v909
    %v916 = vrot.slane %v875, 4
    %v917 = vrot.slane %v876, 4
    %v918 = vrot.slane %v877, 4
    %v922 = vsel %vm442, %v916, 0.0
    %v923 = vrot.slane %v922, 4
    %v924 = vadd.f32 %v922, %v923
    %v925 = vrot.slane %v924, 2
    %v926 = vadd.f32 %v924, %v925
    %v927 = vrot.slane %v926, 1
    %v928 = vadd.f32 %v926, %v927
    %v929 = vsel %vm442, %v917, 0.0
    %v930 = vrot.slane %v929, 4
    %v931 = vadd.f32 %v929, %v930
    %v932 = vrot.slane %v931, 2
    %v933 = vadd.f32 %v931, %v932
    %v934 = vrot.slane %v933, 1
    %v935 = vadd.f32 %v933, %v934
    %v936 = vsel %vm442, %v918, 0.0
    %v937 = vrot.slane %v936, 4
    %v938 = vadd.f32 %v936, %v937
    %v939 = vrot.slane %v938, 2
    %v940 = vadd.f32 %v938, %v939
    %v941 = vrot.slane %v940, 1
    %v942 = vadd.f32 %v940, %v941
    %v943 = vadd.f32 %v928, %v900
    %v944 = vadd.f32 %v935, %v900
    %v945 = vadd.f32 %v942, %v900
    %vm946 = vcmp.eq.s32.totalorder %v66, 3
    %v947 = vsel %vm946, 1, 0
    %vm948 = vcmp.eq.s32.totalorder %v947, 1
    %v949 = vsel %vm948, %v943, 0.0
    %v950 = vsel %vm948, %v944, 0.0
    %v951 = vsel %vm948, %v945, 0.0
    %v952 = vadd.f32 %v910, %v949
    %v953 = vadd.f32 %v911, %v950
    %v954 = vadd.f32 %v912, %v951
    %s955 = scalar_lea.vmem [#allocation6], 432
    %v956 = vld [vmem:[%s955] sm:$0xff]
    %v957 = vld [vmem:[%s955 + $0x8] sm:$0xff]
    %v958 = vld [vmem:[%s955 + $0x10] sm:$0xff]
    %v959 = vmul.f32 %v58, %v956
    %v960 = vmul.f32 %v59, %v957
    %v961 = vmul.f32 %v60, %v958
    %s962 = scalar_lea.vmem [#allocation6], 456
    %v963 = vld [vmem:[%s962] sm:$0xff]
    %v964 = vld [vmem:[%s962 + $0x8] sm:$0xff]
    %v965 = vld [vmem:[%s962 + $0x10] sm:$0xff]
    %969 = vrot.lane.b32.xlu0 %v963, 1
    %v970 = vpop.permute.xlu0 %969
    %971 = vrot.lane.b32.xlu0 %v964, 1
    %v972 = vpop.permute.xlu0 %971
    %973 = vrot.lane.b32.xlu0 %v965, 1
    %v974 = vpop.permute.xlu0 %973
    %v975 = vsel %vm86, %v970, %v972
    %v976 = vsel %vm86, %v972, %v974
    %v981 = vmul.f32 %v61, %v970
    %v982 = vmul.f32 %v62, %v975
    %v983 = vmul.f32 %v63, %v976
    %v984 = vmul.f32 %v64, %v974
    %989 = vrot.lane.b32.xlu0 %v981, 127
    %v990 = vpop.permute.xlu0 %989
    %991 = vrot.lane.b32.xlu0 %v982, 127
    %v992 = vpop.permute.xlu0 %991
    %993 = vrot.lane.b32.xlu0 %v983, 127
    %v994 = vpop.permute.xlu0 %993
    %995 = vrot.lane.b32.xlu0 %v984, 127
    %v996 = vpop.permute.xlu0 %995
    %v997 = vsel %vm109, %v990, %v992
    %v998 = vsel %vm109, %v992, %v994
    %v999 = vsel %vm109, %v994, %v996
    %v1003 = vadd.f32 %v959, %v997
    %v1004 = vadd.f32 %v960, %v998
    %v1005 = vadd.f32 %v961, %v999
    %s1006 = scalar_lea.vmem [#allocation6], 480
    %v1007 = vld [vmem:[%s1006] sm:$0xff]
    %v1008 = vld [vmem:[%s1006 + $0x8] sm:$0xff]
    %v1009 = vld [vmem:[%s1006 + $0x10] sm:$0xff]
    %1013 = vrot.lane.b32.xlu0 %v1007, 2
    %v1014 = vpop.permute.xlu0 %1013
    %1015 = vrot.lane.b32.xlu0 %v1008, 2
    %v1016 = vpop.permute.xlu0 %1015
    %1017 = vrot.lane.b32.xlu0 %v1009, 2
    %v1018 = vpop.permute.xlu0 %1017
    %v1019 = vsel %vm132, %v1014, %v1016
    %v1020 = vsel %vm132, %v1016, %v1018
    %v1025 = vmul.f32 %v61, %v1014
    %v1026 = vmul.f32 %v62, %v1019
    %v1027 = vmul.f32 %v63, %v1020
    %v1028 = vmul.f32 %v64, %v1018
    %1033 = vrot.lane.b32.xlu0 %v1025, 126
    %v1034 = vpop.permute.xlu0 %1033
    %1035 = vrot.lane.b32.xlu0 %v1026, 126
    %v1036 = vpop.permute.xlu0 %1035
    %1037 = vrot.lane.b32.xlu0 %v1027, 126
    %v1038 = vpop.permute.xlu0 %1037
    %1039 = vrot.lane.b32.xlu0 %v1028, 126
    %v1040 = vpop.permute.xlu0 %1039
    %v1041 = vsel %vm155, %v1034, %v1036
    %v1042 = vsel %vm155, %v1036, %v1038
    %v1043 = vsel %vm155, %v1038, %v1040
    %v1047 = vadd.f32 %v1003, %v1041
    %v1048 = vadd.f32 %v1004, %v1042
    %v1049 = vadd.f32 %v1005, %v1043
    %s1050 = scalar_lea.vmem [#allocation6], 504
    %v1051 = vld [vmem:[%s1050] sm:$0xff]
    %v1052 = vld [vmem:[%s1050 + $0x8] sm:$0xff]
    %v1053 = vld [vmem:[%s1050 + $0x10] sm:$0xff]
    %1057 = vrot.lane.b32.xlu0 %v1051, 18
    %v1058 = vpop.permute.xlu0 %1057
    %1059 = vrot.lane.b32.xlu0 %v1052, 18
    %v1060 = vpop.permute.xlu0 %1059
    %1061 = vrot.lane.b32.xlu0 %v1053, 18
    %v1062 = vpop.permute.xlu0 %1061
    %v1063 = vsel %vm178, %v1058, %v1060
    %v1064 = vsel %vm178, %v1060, %v1062
    %v1069 = vmul.f32 %v61, %v1058
    %v1070 = vmul.f32 %v62, %v1063
    %v1071 = vmul.f32 %v63, %v1064
    %v1072 = vmul.f32 %v64, %v1062
    %1077 = vrot.lane.b32.xlu0 %v1069, 110
    %v1078 = vpop.permute.xlu0 %1077
    %1079 = vrot.lane.b32.xlu0 %v1070, 110
    %v1080 = vpop.permute.xlu0 %1079
    %1081 = vrot.lane.b32.xlu0 %v1071, 110
    %v1082 = vpop.permute.xlu0 %1081
    %1083 = vrot.lane.b32.xlu0 %v1072, 110
    %v1084 = vpop.permute.xlu0 %1083
    %v1085 = vsel %vm201, %v1078, %v1080
    %v1086 = vsel %vm201, %v1080, %v1082
    %v1087 = vsel %vm201, %v1082, %v1084
    %v1091 = vadd.f32 %v1047, %v1085
    %v1092 = vadd.f32 %v1048, %v1086
    %v1093 = vadd.f32 %v1049, %v1087
    %s1094 = scalar_lea.vmem [#allocation6], 528
    %v1095 = vld [vmem:[%s1094] sm:$0xff]
    %v1096 = vld [vmem:[%s1094 + $0x8] sm:$0xff]
    %v1097 = vld [vmem:[%s1094 + $0x10] sm:$0xff]
    %1101 = vrot.lane.b32.xlu0 %v1095, 19
    %v1102 = vpop.permute.xlu0 %1101
    %1103 = vrot.lane.b32.xlu0 %v1096, 19
    %v1104 = vpop.permute.xlu0 %1103
    %1105 = vrot.lane.b32.xlu0 %v1097, 19
    %v1106 = vpop.permute.xlu0 %1105
    %v1107 = vsel %vm224, %v1102, %v1104
    %v1108 = vsel %vm224, %v1104, %v1106
    %v1113 = vmul.f32 %v61, %v1102
    %v1114 = vmul.f32 %v62, %v1107
    %v1115 = vmul.f32 %v63, %v1108
    %v1116 = vmul.f32 %v64, %v1106
    %1121 = vrot.lane.b32.xlu0 %v1113, 109
    %v1122 = vpop.permute.xlu0 %1121
    %1123 = vrot.lane.b32.xlu0 %v1114, 109
    %v1124 = vpop.permute.xlu0 %1123
    %1125 = vrot.lane.b32.xlu0 %v1115, 109
    %v1126 = vpop.permute.xlu0 %1125
    %1127 = vrot.lane.b32.xlu0 %v1116, 109
    %v1128 = vpop.permute.xlu0 %1127
    %v1129 = vsel %vm247, %v1122, %v1124
    %v1130 = vsel %vm247, %v1124, %v1126
    %v1131 = vsel %vm247, %v1126, %v1128
    %v1135 = vadd.f32 %v1091, %v1129
    %v1136 = vadd.f32 %v1092, %v1130
    %v1137 = vadd.f32 %v1093, %v1131
    %s1138 = scalar_lea.vmem [#allocation6], 552
    %v1139 = vld [vmem:[%s1138] sm:$0xff]
    %v1140 = vld [vmem:[%s1138 + $0x8] sm:$0xff]
    %v1141 = vld [vmem:[%s1138 + $0x10] sm:$0xff]
    %1145 = vrot.lane.b32.xlu0 %v1139, 20
    %v1146 = vpop.permute.xlu0 %1145
    %1147 = vrot.lane.b32.xlu0 %v1140, 20
    %v1148 = vpop.permute.xlu0 %1147
    %1149 = vrot.lane.b32.xlu0 %v1141, 20
    %v1150 = vpop.permute.xlu0 %1149
    %v1151 = vsel %vm270, %v1146, %v1148
    %v1152 = vsel %vm270, %v1148, %v1150
    %v1157 = vmul.f32 %v61, %v1146
    %v1158 = vmul.f32 %v62, %v1151
    %v1159 = vmul.f32 %v63, %v1152
    %v1160 = vmul.f32 %v64, %v1150
    %1165 = vrot.lane.b32.xlu0 %v1157, 108
    %v1166 = vpop.permute.xlu0 %1165
    %1167 = vrot.lane.b32.xlu0 %v1158, 108
    %v1168 = vpop.permute.xlu0 %1167
    %1169 = vrot.lane.b32.xlu0 %v1159, 108
    %v1170 = vpop.permute.xlu0 %1169
    %1171 = vrot.lane.b32.xlu0 %v1160, 108
    %v1172 = vpop.permute.xlu0 %1171
    %v1173 = vsel %vm293, %v1166, %v1168
    %v1174 = vsel %vm293, %v1168, %v1170
    %v1175 = vsel %vm293, %v1170, %v1172
    %v1179 = vadd.f32 %v1135, %v1173
    %v1180 = vadd.f32 %v1136, %v1174
    %v1181 = vadd.f32 %v1137, %v1175
    %s1182 = scalar_lea.vmem [#allocation6], 576
    %v1183 = vld [vmem:[%s1182] sm:$0xff]
    %v1184 = vld [vmem:[%s1182 + $0x8] sm:$0xff]
    %v1185 = vld [vmem:[%s1182 + $0x10] sm:$0xff]
    %1189 = vrot.lane.b32.xlu0 %v1183, 36
    %v1190 = vpop.permute.xlu0 %1189
    %1191 = vrot.lane.b32.xlu0 %v1184, 36
    %v1192 = vpop.permute.xlu0 %1191
    %1193 = vrot.lane.b32.xlu0 %v1185, 36
    %v1194 = vpop.permute.xlu0 %1193
    %v1195 = vsel %vm316, %v1190, %v1192
    %v1196 = vsel %vm316, %v1192, %v1194
    %v1201 = vmul.f32 %v61, %v1190
    %v1202 = vmul.f32 %v62, %v1195
    %v1203 = vmul.f32 %v63, %v1196
    %v1204 = vmul.f32 %v64, %v1194
    %1209 = vrot.lane.b32.xlu0 %v1201, 92
    %v1210 = vpop.permute.xlu0 %1209
    %1211 = vrot.lane.b32.xlu0 %v1202, 92
    %v1212 = vpop.permute.xlu0 %1211
    %1213 = vrot.lane.b32.xlu0 %v1203, 92
    %v1214 = vpop.permute.xlu0 %1213
    %1215 = vrot.lane.b32.xlu0 %v1204, 92
    %v1216 = vpop.permute.xlu0 %1215
    %v1217 = vsel %vm339, %v1210, %v1212
    %v1218 = vsel %vm339, %v1212, %v1214
    %v1219 = vsel %vm339, %v1214, %v1216
    %v1223 = vadd.f32 %v1179, %v1217
    %v1224 = vadd.f32 %v1180, %v1218
    %v1225 = vadd.f32 %v1181, %v1219
    %s1226 = scalar_lea.vmem [#allocation6], 600
    %v1227 = vld [vmem:[%s1226] sm:$0xff]
    %v1228 = vld [vmem:[%s1226 + $0x8] sm:$0xff]
    %v1229 = vld [vmem:[%s1226 + $0x10] sm:$0xff]
    %1233 = vrot.lane.b32.xlu0 %v1227, 37
    %v1234 = vpop.permute.xlu0 %1233
    %1235 = vrot.lane.b32.xlu0 %v1228, 37
    %v1236 = vpop.permute.xlu0 %1235
    %1237 = vrot.lane.b32.xlu0 %v1229, 37
    %v1238 = vpop.permute.xlu0 %1237
    %v1239 = vsel %vm362, %v1234, %v1236
    %v1240 = vsel %vm362, %v1236, %v1238
    %v1245 = vmul.f32 %v61, %v1234
    %v1246 = vmul.f32 %v62, %v1239
    %v1247 = vmul.f32 %v63, %v1240
    %v1248 = vmul.f32 %v64, %v1238
    %1253 = vrot.lane.b32.xlu0 %v1245, 91
    %v1254 = vpop.permute.xlu0 %1253
    %1255 = vrot.lane.b32.xlu0 %v1246, 91
    %v1256 = vpop.permute.xlu0 %1255
    %1257 = vrot.lane.b32.xlu0 %v1247, 91
    %v1258 = vpop.permute.xlu0 %1257
    %1259 = vrot.lane.b32.xlu0 %v1248, 91
    %v1260 = vpop.permute.xlu0 %1259
    %v1261 = vsel %vm385, %v1254, %v1256
    %v1262 = vsel %vm385, %v1256, %v1258
    %v1263 = vsel %vm385, %v1258, %v1260
    %v1267 = vadd.f32 %v1223, %v1261
    %v1268 = vadd.f32 %v1224, %v1262
    %v1269 = vadd.f32 %v1225, %v1263
    %s1270 = scalar_lea.vmem [#allocation6], 624
    %v1271 = vld [vmem:[%s1270] sm:$0xff]
    %v1272 = vld [vmem:[%s1270 + $0x8] sm:$0xff]
    %v1273 = vld [vmem:[%s1270 + $0x10] sm:$0xff]
    %1277 = vrot.lane.b32.xlu0 %v1271, 38
    %v1278 = vpop.permute.xlu0 %1277
    %1279 = vrot.lane.b32.xlu0 %v1272, 38
    %v1280 = vpop.permute.xlu0 %1279
    %1281 = vrot.lane.b32.xlu0 %v1273, 38
    %v1282 = vpop.permute.xlu0 %1281
    %v1283 = vsel %vm408, %v1278, %v1280
    %v1284 = vsel %vm408, %v1280, %v1282
    %v1289 = vmul.f32 %v61, %v1278
    %v1290 = vmul.f32 %v62, %v1283
    %v1291 = vmul.f32 %v63, %v1284
    %v1292 = vmul.f32 %v64, %v1282
    %1297 = vrot.lane.b32.xlu0 %v1289, 90
    %v1298 = vpop.permute.xlu0 %1297
    %1299 = vrot.lane.b32.xlu0 %v1290, 90
    %v1300 = vpop.permute.xlu0 %1299
    %1301 = vrot.lane.b32.xlu0 %v1291, 90
    %v1302 = vpop.permute.xlu0 %1301
    %1303 = vrot.lane.b32.xlu0 %v1292, 90
    %v1304 = vpop.permute.xlu0 %1303
    %v1305 = vsel %vm431, %v1298, %v1300
    %v1306 = vsel %vm431, %v1300, %v1302
    %v1307 = vsel %vm431, %v1302, %v1304
    %v1311 = vadd.f32 %v1267, %v1305
    %v1312 = vadd.f32 %v1268, %v1306
    %v1313 = vadd.f32 %v1269, %v1307
    %s1314 = sld [smem:[#allocation8 + $0x2]]
    %v1315 = vsel %vm442, %v1311, 0.0
    %v1316 = vrot.slane %v1315, 4
    %v1317 = vadd.f32 %v1315, %v1316
    %v1318 = vrot.slane %v1317, 2
    %v1319 = vadd.f32 %v1317, %v1318
    %v1320 = vrot.slane %v1319, 1
    %v1321 = vadd.f32 %v1319, %v1320
    %v1322 = vsel %vm442, %v1312, 0.0
    %v1323 = vrot.slane %v1322, 4
    %v1324 = vadd.f32 %v1322, %v1323
    %v1325 = vrot.slane %v1324, 2
    %v1326 = vadd.f32 %v1324, %v1325
    %v1327 = vrot.slane %v1326, 1
    %v1328 = vadd.f32 %v1326, %v1327
    %v1329 = vsel %vm442, %v1313, 0.0
    %v1330 = vrot.slane %v1329, 4
    %v1331 = vadd.f32 %v1329, %v1330
    %v1332 = vrot.slane %v1331, 2
    %v1333 = vadd.f32 %v1331, %v1332
    %v1334 = vrot.slane %v1333, 1
    %v1335 = vadd.f32 %v1333, %v1334
    %v1336 = vstv %s1314
    %v1337 = vadd.f32 %v1321, %v1336
    %v1338 = vadd.f32 %v1328, %v1336
    %v1339 = vadd.f32 %v1335, %v1336
    %vm1340 = vcmp.eq.s32.totalorder %v66, 4
    %v1341 = vsel %vm1340, 1, 0
    %vm1342 = vcmp.eq.s32.totalorder %v1341, 1
    %v1343 = vsel %vm1342, %v1337, 0.0
    %v1344 = vsel %vm1342, %v1338, 0.0
    %v1345 = vsel %vm1342, %v1339, 0.0
    %v1346 = vadd.f32 %v952, %v1343
    %v1347 = vadd.f32 %v953, %v1344
    %v1348 = vadd.f32 %v954, %v1345
    %v1352 = vrot.slane %v1311, 4
    %v1353 = vrot.slane %v1312, 4
    %v1354 = vrot.slane %v1313, 4
    %v1358 = vsel %vm442, %v1352, 0.0
    %v1359 = vrot.slane %v1358, 4
    %v1360 = vadd.f32 %v1358, %v1359
    %v1361 = vrot.slane %v1360, 2
    %v1362 = vadd.f32 %v1360, %v1361
    %v1363 = vrot.slane %v1362, 1
    %v1364 = vadd.f32 %v1362, %v1363
    %v1365 = vsel %vm442, %v1353, 0.0
    %v1366 = vrot.slane %v1365, 4
    %v1367 = vadd.f32 %v1365, %v1366
    %v1368 = vrot.slane %v1367, 2
    %v1369 = vadd.f32 %v1367, %v1368
    %v1370 = vrot.slane %v1369, 1
    %v1371 = vadd.f32 %v1369, %v1370
    %v1372 = vsel %vm442, %v1354, 0.0
    %v1373 = vrot.slane %v1372, 4
    %v1374 = vadd.f32 %v1372, %v1373
    %v1375 = vrot.slane %v1374, 2
    %v1376 = vadd.f32 %v1374, %v1375
    %v1377 = vrot.slane %v1376, 1
    %v1378 = vadd.f32 %v1376, %v1377
    %v1379 = vadd.f32 %v1364, %v1336
    %v1380 = vadd.f32 %v1371, %v1336
    %v1381 = vadd.f32 %v1378, %v1336
    %vm1382 = vcmp.eq.s32.totalorder %v66, 5
    %v1383 = vsel %vm1382, 1, 0
    %vm1384 = vcmp.eq.s32.totalorder %v1383, 1
    %v1385 = vsel %vm1384, %v1379, 0.0
    %v1386 = vsel %vm1384, %v1380, 0.0
    %v1387 = vsel %vm1384, %v1381, 0.0
    %v1388 = vadd.f32 %v1346, %v1385
    %v1389 = vadd.f32 %v1347, %v1386
    %v1390 = vadd.f32 %v1348, %v1387
    %v1391 = vtanh.pop %v1388
    %v1392 = vtanh.pop %v1389
    %v1393 = vtanh.pop %v1390
    %1394 = vst [vmem:[#allocation9] sm:$0x3f] %v1391
    %1395 = vst [vmem:[#allocation9 + $0x8] sm:$0x3f] %v1392
    %1396 = vst [vmem:[#allocation9 + $0x10] sm:$0x3f] %v1393
    // Predicated region
    $region26: #{tpu_custom_call.1} parent=1 // pred_check
      _
    $region27: #{tpu_custom_call.1} parent=1 // pred_check_branch
      %1398 = sbr.rel (0) target = $region29
    $region28: #{tpu_custom_call.1} parent=1 // pred_region
      %1400 = vsyncadd [#allocation4], 0
      %s1402 = sshll.u32 [#allocation9], 4
      %s1403 = int_to_ptr.vmem [resolvable:$true] %s1402
      %s1404 = sshll.u32 %s3, 4
      %s1405 = int_to_ptr.hbm [resolvable:$true] %s1404
      %1407 = dma.vmem_to_hbm [thread:$0]  %s1403, 384, %s1405, [#allocation4]
    $region29: #{tpu_custom_call.1} parent=1 // pred_fallthru
      _
    // Predicated region
    $region30: #{tpu_custom_call.1} parent=1 // pred_check
      _
    $region31: #{tpu_custom_call.1} parent=1 // pred_check_branch
      %1409 = sbr.rel (0) target = $region33
    $region32: #{tpu_custom_call.1} parent=1 // pred_region
      %1411 = dma.done [#allocation4], 384
    $region33: #{tpu_custom_call.1} parent=1 // pred_fallthru
      _
    %1412 = vsyncpa [#allocation3], 1
    %1413 = vsyncpa [#allocation7], 1
    %1414 = vsyncpa [#allocation4], 1
    %1415 = vsyncpa [#allocation5], 1

</llo_original>
